<compile_context>
chip_gen: v6e
topology: v6e:2x2x1
jax: 0.10.0
libtpu: 0.0.40
codegen_flags: <defaults>
</compile_context>

<pallas_src>
import jax
import jax.numpy as jnp
import numpy as np
from jax.experimental import pallas as pl
from jax.experimental.pallas import tpu as pltpu

# ---------------- synthetic config (deterministic) ----------------
TASK_EMB_DIM = 32          # task_embedding_dim (D)
TASK_HIDDEN_DIM = 64       # TaskHyperNet hidden dim
INPUT_DIM = 32             # config.input_dim (transformer hidden size H)
REDUCTION_FACTOR = 4
DOWN_SAMPLE = INPUT_DIM // REDUCTION_FACTOR   # d = 8
NUM_LAYERS = 6
LN_EPS = 1e-6

D, HH, H, DS = TASK_EMB_DIM, TASK_HIDDEN_DIM, INPUT_DIM, DOWN_SAMPLE

# ---- packed generator output column layout (lane-dense, 640 = 5*128) ----
UPW_OFF = 0                          # up.weight  -> (H, d)   : 256 cols
UPB_OFF = UPW_OFF + H * DS           # up.bias    -> (H,)     :  32 cols
DNW_OFF = UPB_OFF + H                # down.weight-> (d, H)   : 256 cols
DNB_OFF = DNW_OFF + DS * H           # down.bias  -> (d,)     :   8 cols
GEN_TOTAL = DNB_OFF + DS             # 552 used columns
GEN_PAD = 640                        # padded width (multiple of 128)

# ---- small parameter slab: (176, 128) f32 ----
SMALL_W = 128
TBL_ROW = 0                          # rows [0:8), cols [0:D): embedding table
LAYER_ROW_OFF = 2                    #   rows 0,1 = block_type; rows 2..7 = layer ids
W1_ROW = 8                           # rows [8:104),  cols [0:HH): W1 (3D, HH)
W2_ROW = W1_ROW + 3 * D              # rows [104:168), cols [0:D): W2 (HH, D)
B1_ROW = W2_ROW + HH                 # row 168: b1 (HH)
B2_ROW = B1_ROW + 1                  # row 169: b2 (D)
LNG_ROW = B2_ROW + 1                 # row 170: ln gamma (D)
LNB_ROW = LNG_ROW + 1                # row 171: ln beta  (D)
SMALL_ROWS = 176                     # multiple of 8

# ---- generator slab: (40, 640) f32 ----
GENW_ROW = 0                         # rows [0:D): fused generator weights
GENB_ROW = D                         # row D: fused generator bias
GEN_ROWS = 40                        # multiple of 8

_FLOPS = (2 * (1 * D * HH) * 2       # te / layer_emb parts of W1
          + 2 * (2 * D * HH)         # type part of W1
          + 2 * (2 * HH * D)         # W2
          + 2 * (2 * D * GEN_PAD))   # fused generator matmul
_BYTES = (4                          # layer id scalar
          + 4 * D                    # task embedding
          + 4 * SMALL_ROWS * SMALL_W # small slab
          + 4 * GEN_ROWS * GEN_PAD   # generator slab
          + 4 * 2 * GEN_PAD)         # packed output


# ------------------------- Pallas kernel ---------------------------
def hyper_controller_kernel(lid_ref, te_ref, s_ref, g_ref, out_ref):
    lid = lid_ref[0]                                         # scalar int32 (SMEM)

    # layer-id embedding gather: masked row-sum over the (8, 32) table block
    tbl = s_ref[pl.ds(TBL_ROW, 8), pl.ds(0, D)]              # (8, 32)
    row_ids = jax.lax.broadcasted_iota(jnp.int32, (8, 1), 0)
    layer_emb = jnp.sum(
        jnp.where(row_ids == lid + LAYER_ROW_OFF, tbl, 0.0),
        axis=0, keepdims=True)                               # (1, 32)
    type_emb = s_ref[pl.ds(TBL_ROW, 2), pl.ds(0, D)]         # (2, 32): [ff, self_attn]
    te = te_ref[...]                                         # (1, 32)

    # static slices into the packed parameter slabs
    w1a = s_ref[pl.ds(W1_ROW, D), pl.ds(0, HH)]              # (32, 64)  te part
    w1b = s_ref[pl.ds(W1_ROW + D, D), pl.ds(0, HH)]          # (32, 64)  layer part
    w1c = s_ref[pl.ds(W1_ROW + 2 * D, D), pl.ds(0, HH)]      # (32, 64)  type part
    w2 = s_ref[pl.ds(W2_ROW, HH), pl.ds(0, D)]               # (64, 32)
    b1 = s_ref[pl.ds(B1_ROW, 1), pl.ds(0, HH)]               # (1, 64)
    b2 = s_ref[pl.ds(B2_ROW, 1), pl.ds(0, D)]                # (1, 32)
    ln_g = s_ref[pl.ds(LNG_ROW, 1), pl.ds(0, D)]             # (1, 32)
    ln_b = s_ref[pl.ds(LNB_ROW, 1), pl.ds(0, D)]             # (1, 32)

    gw = g_ref[pl.ds(GENW_ROW, D), :]                        # (32, 640) fused generators
    gb = g_ref[pl.ds(GENB_ROW, 1), :]                        # (1, 640)

    # TaskHyperNet: Linear -> ReLU -> Linear (concat folded into split-W1 dots)
    common = (jnp.dot(te, w1a, preferred_element_type=jnp.float32)
              + jnp.dot(layer_emb, w1b, preferred_element_type=jnp.float32)
              + b1)                                          # (1, 64)
    h = jnp.dot(type_emb, w1c, preferred_element_type=jnp.float32) + common
    h = jnp.maximum(h, 0.0)                                  # (2, 64)
    e = jnp.dot(h, w2, preferred_element_type=jnp.float32) + b2   # (2, 32)

    # unique_hyper_net_layer_norm (eps = 1e-6, biased variance like torch LN)
    mu = jnp.mean(e, axis=-1, keepdims=True)
    var = jnp.mean(jnp.square(e - mu), axis=-1, keepdims=True)
    e = (e - mu) * jax.lax.rsqrt(var + LN_EPS) * ln_g + ln_b

    # all four generators fused into one lane-dense matmul + packed store
    out_ref[...] = jnp.dot(e, gw, preferred_element_type=jnp.float32) + gb


# ------------------------- parameters ------------------------------
def init_params(key):
    ks = jax.random.split(key, 8)

    def lin(k, fan_in, fan_out):
        kw, kb = jax.random.split(k)
        w = jax.random.normal(kw, (fan_in, fan_out), jnp.float32) * 0.02
        b = jax.random.normal(kb, (1, fan_out), jnp.float32) * 0.02
        return w, b

    p = {}
    p["layer_id_emb"] = jax.random.normal(ks[0], (NUM_LAYERS, D), jnp.float32) * 0.02
    p["block_type_emb"] = jax.random.normal(ks[1], (2, D), jnp.float32) * 0.02
    p["w1"], p["b1"] = lin(ks[2], 3 * D, HH)
    p["w2"], p["b2"] = lin(ks[3], HH, D)
    p["ln_g"] = jnp.ones((1, D), jnp.float32)
    p["ln_b"] = jnp.zeros((1, D), jnp.float32)
    p["up_w_gen_w"], p["up_w_gen_b"] = lin(ks[4], D, H * DS)      # up: (H, d) weights
    p["up_b_gen_w"], p["up_b_gen_b"] = lin(ks[5], D, H)           # up: (H,) bias
    p["down_w_gen_w"], p["down_w_gen_b"] = lin(ks[6], D, DS * H)  # down: (d, H) weights
    p["down_b_gen_w"], p["down_b_gen_b"] = lin(ks[7], D, DS)      # down: (d,) bias
    return p


def pack_params(p):
    """One-time host-side packing into two tight parameter slabs."""
    gen_w = jnp.concatenate(
        [p["up_w_gen_w"], p["up_b_gen_w"], p["down_w_gen_w"], p["down_b_gen_w"]],
        axis=1)                                              # (D, 552)
    gen_b = jnp.concatenate(
        [p["up_w_gen_b"], p["up_b_gen_b"], p["down_w_gen_b"], p["down_b_gen_b"]],
        axis=1)                                              # (1, 552)

    small = jnp.zeros((SMALL_ROWS, SMALL_W), jnp.float32)
    small = small.at[TBL_ROW:TBL_ROW + 2, 0:D].set(p["block_type_emb"])
    small = small.at[TBL_ROW + LAYER_ROW_OFF:
                     TBL_ROW + LAYER_ROW_OFF + NUM_LAYERS, 0:D].set(p["layer_id_emb"])
    small = small.at[W1_ROW:W1_ROW + 3 * D, 0:HH].set(p["w1"])
    small = small.at[W2_ROW:W2_ROW + HH, 0:D].set(p["w2"])
    small = small.at[B1_ROW, 0:HH].set(p["b1"][0])
    small = small.at[B2_ROW, 0:D].set(p["b2"][0])
    small = small.at[LNG_ROW, 0:D].set(p["ln_g"][0])
    small = small.at[LNB_ROW, 0:D].set(p["ln_b"][0])

    gen = jnp.zeros((GEN_ROWS, GEN_PAD), jnp.float32)
    gen = gen.at[GENW_ROW:GENW_ROW + D, 0:GEN_TOTAL].set(gen_w)
    gen = gen.at[GENB_ROW, 0:GEN_TOTAL].set(gen_b[0])
    return small, gen


# ------------------------- wrapper ---------------------------------
def adapter_layers_one_hyper_net_controller(small_slab, gen_slab, task_embedding, layer_id):
    lid = jnp.asarray([layer_id], jnp.int32)                 # SMEM scalar
    te = task_embedding.reshape(1, D).astype(jnp.float32)

    packed_out = pl.pallas_call(
        hyper_controller_kernel,
        out_shape=jax.ShapeDtypeStruct((2, GEN_PAD), jnp.float32),
        in_specs=[
            pl.BlockSpec(memory_space=pltpu.MemorySpace.SMEM),   # layer_id
            pl.BlockSpec(memory_space=pltpu.MemorySpace.VMEM),   # task embedding (1, 32)
            pl.BlockSpec(memory_space=pltpu.MemorySpace.VMEM),   # small slab (176, 128)
            pl.BlockSpec(memory_space=pltpu.MemorySpace.VMEM),   # generator slab (40, 640)
        ],
        out_specs=pl.BlockSpec(memory_space=pltpu.MemorySpace.VMEM),
        cost_estimate=pl.CostEstimate(
            flops=_FLOPS, transcendentals=2, bytes_accessed=_BYTES),
    )(lid, te, small_slab, gen_slab)

    def block(i):
        row = packed_out[i]
        return {
            "up": {
                "weight": row[UPW_OFF:UPW_OFF + H * DS].reshape(H, DS),
                "bias": row[UPB_OFF:UPB_OFF + H],
            },
            "down": {
                "weight": row[DNW_OFF:DNW_OFF + DS * H].reshape(DS, H),
                "bias": row[DNB_OFF:DNB_OFF + DS],
            },
        }

    return {"feed_forward": block(0), "self_attention": block(1)}


# ------------------- pure-JAX reference (for checking) -------------
def reference(params, task_embedding, layer_id):
    te = task_embedding.reshape(-1)
    layer_emb = params["layer_id_emb"][layer_id]

    def cond_emb(block_type):
        t = params["block_type_emb"][block_type]
        x = jnp.concatenate([te, layer_emb, t])
        h = jnp.maximum(x @ params["w1"] + params["b1"][0], 0.0)
        e = h @ params["w2"] + params["b2"][0]
        mu = jnp.mean(e)
        var = jnp.mean(jnp.square(e - mu))
        return (e - mu) / jnp.sqrt(var + LN_EPS) * params["ln_g"][0] + params["ln_b"][0]

    def block(e):
        return {
            "up": {
                "weight": (e @ params["up_w_gen_w"] + params["up_w_gen_b"][0]).reshape(H, DS),
                "bias": e @ params["up_b_gen_w"] + params["up_b_gen_b"][0],
            },
            "down": {
                "weight": (e @ params["down_w_gen_w"] + params["down_w_gen_b"][0]).reshape(DS, H),
                "bias": e @ params["down_b_gen_w"] + params["down_b_gen_b"][0],
            },
        }

    return {"feed_forward": block(cond_emb(0)), "self_attention": block(cond_emb(1))}


if __name__ == "__main__":
    key = jax.random.PRNGKey(0)
    kp, kx = jax.random.split(key)
    raw = init_params(kp)
    small_slab, gen_slab = pack_params(raw)
    task_embedding = jax.random.normal(kx, (TASK_EMB_DIM,), jnp.float32)
    layer_id = 3

    out = adapter_layers_one_hyper_net_controller(small_slab, gen_slab, task_embedding, layer_id)
    out = jax.block_until_ready(out)

    ref = reference(raw, task_embedding, layer_id)
    for blk in ("feed_forward", "self_attention"):
        for part in ("up", "down"):
            for name in ("weight", "bias"):
                np.testing.assert_allclose(
                    np.asarray(out[blk][part][name]),
                    np.asarray(ref[blk][part][name]),
                    rtol=1e-5, atol=1e-5,
                )

    print("KERNEL_OK")
</pallas_src>

<mosaic_0001>
module attributes {stable_mosaic.version = 11 : i64} {
  func.func @hyper_controller_kernel(%arg0: memref<1xi32, #tpu.memory_space<smem>>, %arg1: memref<1x32xf32, #tpu.memory_space<vmem>>, %arg2: memref<176x128xf32, #tpu.memory_space<vmem>>, %arg3: memref<40x640xf32, #tpu.memory_space<vmem>>, %arg4: memref<2x640xf32, #tpu.memory_space<vmem>>) attributes {dimension_semantics = [], scalar_prefetch = 0 : i64, scratch_operands = 0 : i64, tpu.core_type = #tpu.core_type<tc>} {
    %c0 = arith.constant 0 : index
    %0 = memref.load %arg0[%c0] : memref<1xi32, #tpu.memory_space<smem>>
    %c0_0 = arith.constant 0 : index
    %c0_1 = arith.constant 0 : index
    %1 = vector.load %arg2[%c0_0, %c0_1] : memref<176x128xf32, #tpu.memory_space<vmem>>, vector<8x32xf32>
    %2 = tpu.iota {dimensions = array<i32: 0>} : vector<8x1xi32>
    %c2_i32 = arith.constant 2 : i32
    %3 = arith.addi %0, %c2_i32 : i32
    %4 = vector.broadcast %3 : i32 to vector<8x1xi32>
    %5 = arith.cmpi eq, %2, %4 : vector<8x1xi32>
    %cst = arith.constant 0.000000e+00 : f32
    %6 = vector.shape_cast %5 : vector<8x1xi1> to vector<8x1xi1>
    %7 = vector.broadcast %6 : vector<8x1xi1> to vector<8x32xi1>
    %8 = vector.broadcast %cst : f32 to vector<8x32xf32>
    %9 = arith.select %7, %1, %8 : vector<8x32xi1>, vector<8x32xf32>
    %cst_2 = arith.constant dense<0.000000e+00> : vector<32xf32>
    %10 = vector.multi_reduction <add>, %9, %cst_2 [0] : vector<8x32xf32> to vector<32xf32>
    %11 = vector.shape_cast %10 : vector<32xf32> to vector<1x32xf32>
    %c0_3 = arith.constant 0 : index
    %c0_4 = arith.constant 0 : index
    %12 = vector.load %arg2[%c0_3, %c0_4] : memref<176x128xf32, #tpu.memory_space<vmem>>, vector<2x32xf32>
    %c0_5 = arith.constant 0 : index
    %c0_6 = arith.constant 0 : index
    %13 = vector.load %arg1[%c0_5, %c0_6] : memref<1x32xf32, #tpu.memory_space<vmem>>, vector<1x32xf32>
    %c8 = arith.constant 8 : index
    %c0_7 = arith.constant 0 : index
    %14 = vector.load %arg2[%c8, %c0_7] : memref<176x128xf32, #tpu.memory_space<vmem>>, vector<32x64xf32>
    %c40 = arith.constant 40 : index
    %c0_8 = arith.constant 0 : index
    %15 = vector.load %arg2[%c40, %c0_8] : memref<176x128xf32, #tpu.memory_space<vmem>>, vector<32x64xf32>
    %c72 = arith.constant 72 : index
    %c0_9 = arith.constant 0 : index
    %16 = vector.load %arg2[%c72, %c0_9] : memref<176x128xf32, #tpu.memory_space<vmem>>, vector<32x64xf32>
    %c104 = arith.constant 104 : index
    %c0_10 = arith.constant 0 : index
    %17 = vector.load %arg2[%c104, %c0_10] : memref<176x128xf32, #tpu.memory_space<vmem>>, vector<64x32xf32>
    %c168 = arith.constant 168 : index
    %c0_11 = arith.constant 0 : index
    %18 = vector.load %arg2[%c168, %c0_11] : memref<176x128xf32, #tpu.memory_space<vmem>>, vector<1x64xf32>
    %c169 = arith.constant 169 : index
    %c0_12 = arith.constant 0 : index
    %19 = vector.load %arg2[%c169, %c0_12] : memref<176x128xf32, #tpu.memory_space<vmem>>, vector<1x32xf32>
    %c170 = arith.constant 170 : index
    %c0_13 = arith.constant 0 : index
    %20 = vector.load %arg2[%c170, %c0_13] : memref<176x128xf32, #tpu.memory_space<vmem>>, vector<1x32xf32>
    %c171 = arith.constant 171 : index
    %c0_14 = arith.constant 0 : index
    %21 = vector.load %arg2[%c171, %c0_14] : memref<176x128xf32, #tpu.memory_space<vmem>>, vector<1x32xf32>
    %c0_15 = arith.constant 0 : index
    %c0_16 = arith.constant 0 : index
    %22 = vector.load %arg3[%c0_15, %c0_16] : memref<40x640xf32, #tpu.memory_space<vmem>>, vector<32x640xf32>
    %c32 = arith.constant 32 : index
    %c0_17 = arith.constant 0 : index
    %23 = vector.load %arg3[%c32, %c0_17] : memref<40x640xf32, #tpu.memory_space<vmem>>, vector<1x640xf32>
    %cst_18 = arith.constant dense<0.000000e+00> : vector<1x64xf32>
    %24 = tpu.matmul %13, %14, %cst_18 {dimension_numbers = #tpu.dot_dimension_numbers<[1], [0], [0], [1], [0, 0, 1, 1], [], []>} : vector<1x32xf32>, vector<32x64xf32>, vector<1x64xf32> -> vector<1x64xf32>
    %cst_19 = arith.constant dense<0.000000e+00> : vector<1x64xf32>
    %25 = tpu.matmul %11, %15, %cst_19 {dimension_numbers = #tpu.dot_dimension_numbers<[1], [0], [0], [1], [0, 0, 1, 1], [], []>} : vector<1x32xf32>, vector<32x64xf32>, vector<1x64xf32> -> vector<1x64xf32>
    %26 = arith.addf %24, %25 : vector<1x64xf32>
    %27 = arith.addf %26, %18 : vector<1x64xf32>
    %cst_20 = arith.constant dense<0.000000e+00> : vector<2x64xf32>
    %28 = tpu.matmul %12, %16, %cst_20 {dimension_numbers = #tpu.dot_dimension_numbers<[1], [0], [0], [1], [0, 0, 1, 1], [], []>} : vector<2x32xf32>, vector<32x64xf32>, vector<2x64xf32> -> vector<2x64xf32>
    %29 = vector.broadcast %27 : vector<1x64xf32> to vector<2x64xf32>
    %30 = arith.addf %28, %29 : vector<2x64xf32>
    %cst_21 = arith.constant 0.000000e+00 : f32
    %31 = vector.broadcast %cst_21 : f32 to vector<2x64xf32>
    %32 = arith.maximumf %30, %31 : vector<2x64xf32>
    %cst_22 = arith.constant dense<0.000000e+00> : vector<2x32xf32>
    %33 = tpu.matmul %32, %17, %cst_22 {dimension_numbers = #tpu.dot_dimension_numbers<[1], [0], [0], [1], [0, 0, 1, 1], [], []>} : vector<2x64xf32>, vector<64x32xf32>, vector<2x32xf32> -> vector<2x32xf32>
    %34 = vector.broadcast %19 : vector<1x32xf32> to vector<2x32xf32>
    %35 = arith.addf %33, %34 : vector<2x32xf32>
    %cst_23 = arith.constant dense<0.000000e+00> : vector<2xf32>
    %36 = vector.multi_reduction <add>, %35, %cst_23 [1] : vector<2x32xf32> to vector<2xf32>
    %37 = vector.shape_cast %36 : vector<2xf32> to vector<2x1xf32>
    %cst_24 = arith.constant 3.200000e+01 : f32
    %38 = vector.broadcast %cst_24 : f32 to vector<2x1xf32>
    %39 = arith.divf %37, %38 : vector<2x1xf32>
    %40 = vector.broadcast %39 : vector<2x1xf32> to vector<2x32xf32>
    %41 = arith.subf %35, %40 : vector<2x32xf32>
    %42 = arith.mulf %41, %41 : vector<2x32xf32>
    %cst_25 = arith.constant dense<0.000000e+00> : vector<2xf32>
    %43 = vector.multi_reduction <add>, %42, %cst_25 [1] : vector<2x32xf32> to vector<2xf32>
    %44 = vector.shape_cast %43 : vector<2xf32> to vector<2x1xf32>
    %cst_26 = arith.constant 3.200000e+01 : f32
    %45 = vector.broadcast %cst_26 : f32 to vector<2x1xf32>
    %46 = arith.divf %44, %45 : vector<2x1xf32>
    %47 = vector.broadcast %39 : vector<2x1xf32> to vector<2x32xf32>
    %48 = arith.subf %35, %47 : vector<2x32xf32>
    %cst_27 = arith.constant 9.99999997E-7 : f32
    %49 = vector.broadcast %cst_27 : f32 to vector<2x1xf32>
    %50 = arith.addf %46, %49 : vector<2x1xf32>
    %51 = math.rsqrt %50 : vector<2x1xf32>
    %52 = vector.broadcast %51 : vector<2x1xf32> to vector<2x32xf32>
    %53 = arith.mulf %48, %52 : vector<2x32xf32>
    %54 = vector.broadcast %20 : vector<1x32xf32> to vector<2x32xf32>
    %55 = arith.mulf %53, %54 : vector<2x32xf32>
    %56 = vector.broadcast %21 : vector<1x32xf32> to vector<2x32xf32>
    %57 = arith.addf %55, %56 : vector<2x32xf32>
    %cst_28 = arith.constant dense<0.000000e+00> : vector<2x640xf32>
    %58 = tpu.matmul %57, %22, %cst_28 {dimension_numbers = #tpu.dot_dimension_numbers<[1], [0], [0], [1], [0, 0, 1, 1], [], []>} : vector<2x32xf32>, vector<32x640xf32>, vector<2x640xf32> -> vector<2x640xf32>
    %59 = vector.broadcast %23 : vector<1x640xf32> to vector<2x640xf32>
    %60 = arith.addf %58, %59 : vector<2x640xf32>
    %c0_29 = arith.constant 0 : index
    %c0_30 = arith.constant 0 : index
    %61 = vector.load %arg4[%c0_29, %c0_30] : memref<2x640xf32, #tpu.memory_space<vmem>>, vector<2x640xf32>
    tpu.vector_store %arg4[%c0_29, %c0_30], %60 {strides = array<i32>} : memref<2x640xf32, #tpu.memory_space<vmem>>, vector<2x640xf32>,
    return
  }
}

</mosaic_0001>

<llo_original>
// kernel: tpu_custom_call.1
$region0: #{tpu_custom_call.1}
  #allocation0 [shape = 'u32[]', space=smem, size = 0x4, offset = 0x4, fixed_abs, tag = 'smem constant byte address 0x4 - core index']
  #allocation1 [shape = 'u32[144,128]{1,0:T(1,128)}', space=vmem, size = 0x12000, scoped, tag = 'internal scratch']
  #allocation2 [shape = 's32[1]{0:T(128)S(6)}', space=smem, size = 0x200, scoped, tag = 'scoped memory for tpu_custom_call.1']
  %s0 = inlined_call_operand.<no memory space> [shape: s32[1], index: 0, kind: input, shape index: {}]
  %s1 = inlined_call_operand.vmem [shape: f32[1,32], index: 1, kind: input, shape index: {}]
  %s2 = inlined_call_operand.hbm [shape: f32[176,128], index: 2, kind: input, shape index: {}]
  %s3 = inlined_call_operand.hbm [shape: f32[40,640], index: 3, kind: input, shape index: {}]
  %s4 = inlined_call_operand.hbm [shape: f32[2,640], index: 4, kind: output, shape index: {}]
  %s5 = sld [smem:[#allocation0]]
  $region34: #{tpu_custom_call.1} parent=0
    _
  %s7 = ssub.s32 1, %s5
  %s8 = scalar_select 0, %s7, %s5
  %9 = sst [smem:[#allocation2]] %s0
  $region1: #{tpu_custom_call.1} parent=0
    #allocation3 [shape = 'u8[90112]{0}', space=vmem, size = 0x16000, scoped, tag = 'input window, operand 2, single buffered']
    #allocation4 [shape = 's32[1]{0}', space=sflag, size = 0x4, scoped, tag = 'scoped memory for tpu_custom_call.1']
    #allocation5 [shape = 's32[1]{0}', space=sflag, size = 0x4, scoped, tag = 'scoped memory for tpu_custom_call.1']
    #allocation6 [shape = 'u8[102400]{0}', space=vmem, size = 0x19000, scoped, tag = 'input window, operand 3, single buffered']
    #allocation7 [shape = 's32[1]{0}', space=sflag, size = 0x4, scoped, tag = 'scoped memory for tpu_custom_call.1']
    #allocation8 [shape = 'u8[5120]{0}', space=vmem, size = 0x1400, scoped, tag = 'output window, operand 0, single buffered']
    %10 = vsyncpa [#allocation4], 0
    %11 = vsyncpa [#allocation7], 0
    %12 = vsyncpa [#allocation5], 0
    // Predicated region
    $region2: #{tpu_custom_call.1} parent=1 // pred_check
      _
    $region3: #{tpu_custom_call.1} parent=1 // pred_check_branch
      %14 = sbr.rel (0) target = $region5
    $region4: #{tpu_custom_call.1} parent=1 // pred_region
      _
    $region5: #{tpu_custom_call.1} parent=1 // pred_fallthru
      _
    // Predicated region
    $region6: #{tpu_custom_call.1} parent=1 // pred_check
      _
    $region7: #{tpu_custom_call.1} parent=1 // pred_check_branch
      %16 = sbr.rel (0) target = $region9
    $region8: #{tpu_custom_call.1} parent=1 // pred_region
      _
    $region9: #{tpu_custom_call.1} parent=1 // pred_fallthru
      _
    // Predicated region
    $region10: #{tpu_custom_call.1} parent=1 // pred_check
      _
    $region11: #{tpu_custom_call.1} parent=1 // pred_check_branch
      %18 = sbr.rel (0) target = $region13
    $region12: #{tpu_custom_call.1} parent=1 // pred_region
      %s20 = ssub.s32 2816, 2816
      %21 = vsyncadd [#allocation4], %s20
      %s22 = sshll.u32 [#allocation3], 4
      %s23 = int_to_ptr.vmem [resolvable:$true] %s22
      %28 = dma.hbm_to_vmem [thread:$0]  %s2, 2816, %s23, [#allocation4], 128, 128, 8
    $region13: #{tpu_custom_call.1} parent=1 // pred_fallthru
      _
    // Predicated region
    $region14: #{tpu_custom_call.1} parent=1 // pred_check
      _
    $region15: #{tpu_custom_call.1} parent=1 // pred_check_branch
      %30 = sbr.rel (0) target = $region17
    $region16: #{tpu_custom_call.1} parent=1 // pred_region
      %s32 = ssub.s32 3200, 3200
      %33 = vsyncadd [#allocation7], %s32
      %s34 = sshll.u32 [#allocation6], 4
      %s35 = int_to_ptr.vmem [resolvable:$true] %s34
      %40 = dma.hbm_to_vmem [thread:$0]  %s3, 3200, %s35, [#allocation7], 640, 640, 40
    $region17: #{tpu_custom_call.1} parent=1 // pred_fallthru
      _
    // Predicated region
    $region18: #{tpu_custom_call.1} parent=1 // pred_check
      _
    $region19: #{tpu_custom_call.1} parent=1 // pred_check_branch
      %42 = sbr.rel (0) target = $region21
    $region20: #{tpu_custom_call.1} parent=1 // pred_region
      %43 = dma.done [#allocation4], 2816
    $region21: #{tpu_custom_call.1} parent=1 // pred_fallthru
      _
    // Predicated region
    $region22: #{tpu_custom_call.1} parent=1 // pred_check
      _
    $region23: #{tpu_custom_call.1} parent=1 // pred_check_branch
      %45 = sbr.rel (0) target = $region25
    $region24: #{tpu_custom_call.1} parent=1 // pred_region
      %46 = dma.done [#allocation7], 3200
    $region25: #{tpu_custom_call.1} parent=1 // pred_fallthru
      _
    %s47 = sld [smem:[#allocation2]]
    %v48 = vld [vmem:[#allocation3] sm:$0xff]
    %v49 = vlaneseq
    %v50 = vshrl.u32 %v49, 7
    %s51 = sadd.s32 %s47, 2
    %v52 = vstv %s51
    %vm53 = vcmp.eq.s32.totalorder %v50, %v52
    %v54 = vsel %vm53, 1, 0
    %vm55 = vcmp.eq.s32.totalorder %v54, 1
    %v56 = vsel %vm55, %v48, 0.0
    %vm57 = vcmask 261120
    %v58 = vsel %vm57, %v56, 0.0
    %v59 = vrot.slane %v58, 4
    %v60 = vadd.f32 %v58, %v59
    %v61 = vrot.slane %v60, 2
    %v62 = vadd.f32 %v60, %v61
    %v63 = vrot.slane %v62, 1
    %v64 = vadd.f32 %v62, %v63
    %v65 = vld [vmem:[#allocation3] sm:$0x3]
    %v66 = vld [vmem:[%s1] sm:$0x1]
    %v67 = vld [vmem:[#allocation3 + $0x8] sm:$0xff]
    %v68 = vld [vmem:[#allocation3 + $0x10] sm:$0xff]
    %v69 = vld [vmem:[#allocation3 + $0x18] sm:$0xff]
    %v70 = vld [vmem:[#allocation3 + $0x20] sm:$0xff]
    %v71 = vld [vmem:[#allocation3 + $0x28] sm:$0xff]
    %v72 = vld [vmem:[#allocation3 + $0x30] sm:$0xff]
    %v73 = vld [vmem:[#allocation3 + $0x38] sm:$0xff]
    %v74 = vld [vmem:[#allocation3 + $0x40] sm:$0xff]
    %v75 = vld [vmem:[#allocation3 + $0x48] sm:$0xff]
    %v76 = vld [vmem:[#allocation3 + $0x50] sm:$0xff]
    %v77 = vld [vmem:[#allocation3 + $0x58] sm:$0xff]
    %v78 = vld [vmem:[#allocation3 + $0x60] sm:$0xff]
    %v79 = vld [vmem:[#allocation3 + $0x68] sm:$0xff]
    %v80 = vld [vmem:[#allocation3 + $0x70] sm:$0xff]
    %v81 = vld [vmem:[#allocation3 + $0x78] sm:$0xff]
    %v82 = vld [vmem:[#allocation3 + $0x80] sm:$0xff]
    %v83 = vld [vmem:[#allocation3 + $0x88] sm:$0xff]
    %v84 = vld [vmem:[#allocation3 + $0x90] sm:$0xff]
    %v85 = vld [vmem:[#allocation3 + $0x98] sm:$0xff]
    %v86 = vld [vmem:[#allocation3 + $0xa0] sm:$0xff]
    %v87 = vld [vmem:[#allocation3 + $0xa8] sm:$0x1]
    %v88 = vld [vmem:[#allocation3 + $0xa9] sm:$0x1]
    %v89 = vld [vmem:[#allocation3 + $0xaa] sm:$0x1]
    %v90 = vld [vmem:[#allocation3 + $0xab] sm:$0x1]
    %v91 = vld [vmem:[#allocation6] sm:$0xff]
    %v92 = vld [vmem:[#allocation6 + $0x8] sm:$0xff]
    %v93 = vld [vmem:[#allocation6 + $0x10] sm:$0xff]
    %v94 = vld [vmem:[#allocation6 + $0x18] sm:$0xff]
    %v95 = vld [vmem:[#allocation6 + $0x20] sm:$0xff]
    %v96 = vld [vmem:[#allocation6 + $0x28] sm:$0xff]
    %v97 = vld [vmem:[#allocation6 + $0x30] sm:$0xff]
    %v98 = vld [vmem:[#allocation6 + $0x38] sm:$0xff]
    %v99 = vld [vmem:[#allocation6 + $0x40] sm:$0xff]
    %v100 = vld [vmem:[#allocation6 + $0x48] sm:$0xff]
    %v101 = vld [vmem:[#allocation6 + $0x50] sm:$0xff]
    %v102 = vld [vmem:[#allocation6 + $0x58] sm:$0xff]
    %v103 = vld [vmem:[#allocation6 + $0x60] sm:$0xff]
    %v104 = vld [vmem:[#allocation6 + $0x68] sm:$0xff]
    %v105 = vld [vmem:[#allocation6 + $0x70] sm:$0xff]
    %v106 = vld [vmem:[#allocation6 + $0x78] sm:$0xff]
    %v107 = vld [vmem:[#allocation6 + $0x80] sm:$0xff]
    %v108 = vld [vmem:[#allocation6 + $0x88] sm:$0xff]
    %v109 = vld [vmem:[#allocation6 + $0x90] sm:$0xff]
    %v110 = vld [vmem:[#allocation6 + $0x98] sm:$0xff]
    %s111 = scalar_lea.vmem [#allocation6], 160
    %v112 = vld [vmem:[%s111] ss:$8 sm:$0xf]
    %v113 = vld [vmem:[%s111] ss:$8 sm:$0x10]
    %v114 = vor.u32 %v112, %v113
    %v116 = vsel %vm57, %v64, 0
    %118 = vmatprep.subr.mxu0 0.0
    %119 = vmatpush1.msra.mxu0 0.0
    %120 = vmatprep.subr.mxu0 0.0
    %121 = vmatpush1.msra.mxu0 0.0
    %122 = vmatprep.subr.mxu0 0.0
    %123 = vmatpush1.msra.mxu0 0.0
    %124 = vmatprep.subr.mxu0 0.0
    %125 = vmatpush1.msra.mxu0 0.0
    %126 = vmatprep.subr.mxu0 0.0
    %127 = vmatpush1.msra.mxu0 0.0
    %128 = vmatprep.subr.mxu0 0.0
    %129 = vmatpush1.msra.mxu0 0.0
    %130 = vmatprep.subr.mxu0 0.0
    %131 = vmatpush1.msra.mxu0 0.0
    %132 = vmatprep.subr.mxu0 0.0
    %133 = vmatpush1.msra.mxu0 0.0
    %134 = vmatprep.subr.mxu0 0.0
    %135 = vmatpush1.msra.mxu0 0.0
    %136 = vmatprep.subr.mxu0 0.0
    %137 = vmatpush1.msra.mxu0 0.0
    %138 = vmatprep.subr.mxu0 0.0
    %139 = vmatpush1.msra.mxu0 0.0
    %140 = vmatprep.subr.mxu0 0.0
    %141 = vmatpush1.msra.mxu0 0.0
    %142 = vmatprep.subr.mxu0 0.0
    %143 = vmatpush1.msra.mxu0 %v74
    %144 = vmatprep.subr.mxu0 0.0
    %145 = vmatpush1.msra.mxu0 %v73
    %146 = vmatprep.subr.mxu0 0.0
    %147 = vmatpush1.msra.mxu0 %v72
    %148 = vmatprep.subr.mxu0 0.0
    %149 = vmatpush1.msra.mxu0 %v71
    %150 = vmatprep.subr.mxu0 0.0
    %151 = vmatpush2.msra.mxu0 0.0
    %152 = vmatprep.subr.mxu0 0.0
    %153 = vmatpush2.msra.mxu0 0.0
    %154 = vmatprep.subr.mxu0 0.0
    %155 = vmatpush2.msra.mxu0 0.0
    %156 = vmatprep.subr.mxu0 0.0
    %157 = vmatpush2.msra.mxu0 0.0
    %158 = vmatprep.subr.mxu0 0.0
    %159 = vmatpush2.msra.mxu0 0.0
    %160 = vmatprep.subr.mxu0 0.0
    %161 = vmatpush2.msra.mxu0 0.0
    %162 = vmatprep.subr.mxu0 0.0
    %163 = vmatpush2.msra.mxu0 0.0
    %164 = vmatprep.subr.mxu0 0.0
    %165 = vmatpush2.msra.mxu0 0.0
    %166 = vmatprep.subr.mxu0 0.0
    %167 = vmatpush2.msra.mxu0 0.0
    %168 = vmatprep.subr.mxu0 0.0
    %169 = vmatpush2.msra.mxu0 0.0
    %170 = vmatprep.subr.mxu0 0.0
    %171 = vmatpush2.msra.mxu0 0.0
    %172 = vmatprep.subr.mxu0 0.0
    %173 = vmatpush2.msra.mxu0 0.0
    %174 = vmatprep.subr.mxu0 0.0
    %175 = vmatpush2.msra.mxu0 0.0
    %176 = vmatprep.subr.mxu0 0.0
    %177 = vmatpush2.msra.mxu0 0.0
    %178 = vmatprep.subr.mxu0 0.0
    %179 = vmatpush2.msra.mxu0 0.0
    %180 = vmatprep.subr.mxu0 0.0
    %181 = vmatpush2.msra.mxu0 0.0
    %182 = vmatprep.mubr.f32.mxu0 0.0
    %183 = vmatmul.mubr.f32.gmra.mxu0 %v116
    %v184 = vpop.f32.mrf.mxu0
    %v185 = vadd.f32 0.0, %v184
    %v186 = vpop.f32.mrf.mxu0
    %187 = vdwg.mxu0
    %v189 = vsel %vm57, %v66, 0
    %191 = vmatprep.subr.mxu0 0.0
    %192 = vmatpush1.msra.mxu0 0.0
    %193 = vmatprep.subr.mxu0 0.0
    %194 = vmatpush1.msra.mxu0 0.0
    %195 = vmatprep.subr.mxu0 0.0
    %196 = vmatpush1.msra.mxu0 0.0
    %197 = vmatprep.subr.mxu0 0.0
    %198 = vmatpush1.msra.mxu0 0.0
    %199 = vmatprep.subr.mxu0 0.0
    %200 = vmatpush1.msra.mxu0 0.0
    %201 = vmatprep.subr.mxu0 0.0
    %202 = vmatpush1.msra.mxu0 0.0
    %203 = vmatprep.subr.mxu0 0.0
    %204 = vmatpush1.msra.mxu0 0.0
    %205 = vmatprep.subr.mxu0 0.0
    %206 = vmatpush1.msra.mxu0 0.0
    %207 = vmatprep.subr.mxu0 0.0
    %208 = vmatpush1.msra.mxu0 0.0
    %209 = vmatprep.subr.mxu0 0.0
    %210 = vmatpush1.msra.mxu0 0.0
    %211 = vmatprep.subr.mxu0 0.0
    %212 = vmatpush1.msra.mxu0 0.0
    %213 = vmatprep.subr.mxu0 0.0
    %214 = vmatpush1.msra.mxu0 0.0
    %215 = vmatprep.subr.mxu0 0.0
    %216 = vmatpush1.msra.mxu0 %v70
    %217 = vmatprep.subr.mxu0 0.0
    %218 = vmatpush1.msra.mxu0 %v69
    %219 = vmatprep.subr.mxu0 0.0
    %220 = vmatpush1.msra.mxu0 %v68
    %221 = vmatprep.subr.mxu0 0.0
    %222 = vmatpush1.msra.mxu0 %v67
    %223 = vmatprep.subr.mxu0 0.0
    %224 = vmatpush2.msra.mxu0 0.0
    %225 = vmatprep.subr.mxu0 0.0
    %226 = vmatpush2.msra.mxu0 0.0
    %227 = vmatprep.subr.mxu0 0.0
    %228 = vmatpush2.msra.mxu0 0.0
    %229 = vmatprep.subr.mxu0 0.0
    %230 = vmatpush2.msra.mxu0 0.0
    %231 = vmatprep.subr.mxu0 0.0
    %232 = vmatpush2.msra.mxu0 0.0
    %233 = vmatprep.subr.mxu0 0.0
    %234 = vmatpush2.msra.mxu0 0.0
    %235 = vmatprep.subr.mxu0 0.0
    %236 = vmatpush2.msra.mxu0 0.0
    %237 = vmatprep.subr.mxu0 0.0
    %238 = vmatpush2.msra.mxu0 0.0
    %239 = vmatprep.subr.mxu0 0.0
    %240 = vmatpush2.msra.mxu0 0.0
    %241 = vmatprep.subr.mxu0 0.0
    %242 = vmatpush2.msra.mxu0 0.0
    %243 = vmatprep.subr.mxu0 0.0
    %244 = vmatpush2.msra.mxu0 0.0
    %245 = vmatprep.subr.mxu0 0.0
    %246 = vmatpush2.msra.mxu0 0.0
    %247 = vmatprep.subr.mxu0 0.0
    %248 = vmatpush2.msra.mxu0 0.0
    %249 = vmatprep.subr.mxu0 0.0
    %250 = vmatpush2.msra.mxu0 0.0
    %251 = vmatprep.subr.mxu0 0.0
    %252 = vmatpush2.msra.mxu0 0.0
    %253 = vmatprep.subr.mxu0 0.0
    %254 = vmatpush2.msra.mxu0 0.0
    %255 = vmatprep.mubr.f32.mxu0 0.0
    %256 = vmatmul.mubr.f32.gmra.mxu0 %v189
    %v257 = vpop.f32.mrf.mxu0
    %v258 = vadd.f32 %v185, %v257
    %v259 = vpop.f32.mrf.mxu0
    %260 = vdwg.mxu0
    %v261 = vadd.f32 %v258, %v87
    %v262 = vlaneseq
    %v263 = vshrl.u32 %v262, 7
    %v264 = vsub.s32 0, %v263
    %v265 = vrot.slane %v261, %v264
    %v267 = vsel %vm57, %v65, 0
    %269 = vmatprep.subr.mxu0 0.0
    %270 = vmatpush1.msra.mxu0 0.0
    %271 = vmatprep.subr.mxu0 0.0
    %272 = vmatpush1.msra.mxu0 0.0
    %273 = vmatprep.subr.mxu0 0.0
    %274 = vmatpush1.msra.mxu0 0.0
    %275 = vmatprep.subr.mxu0 0.0
    %276 = vmatpush1.msra.mxu0 0.0
    %277 = vmatprep.subr.mxu0 0.0
    %278 = vmatpush1.msra.mxu0 0.0
    %279 = vmatprep.subr.mxu0 0.0
    %280 = vmatpush1.msra.mxu0 0.0
    %281 = vmatprep.subr.mxu0 0.0
    %282 = vmatpush1.msra.mxu0 0.0
    %283 = vmatprep.subr.mxu0 0.0
    %284 = vmatpush1.msra.mxu0 0.0
    %285 = vmatprep.subr.mxu0 0.0
    %286 = vmatpush1.msra.mxu0 0.0
    %287 = vmatprep.subr.mxu0 0.0
    %288 = vmatpush1.msra.mxu0 0.0
    %289 = vmatprep.subr.mxu0 0.0
    %290 = vmatpush1.msra.mxu0 0.0
    %291 = vmatprep.subr.mxu0 0.0
    %292 = vmatpush1.msra.mxu0 0.0
    %293 = vmatprep.subr.mxu0 0.0
    %294 = vmatpush1.msra.mxu0 %v78
    %295 = vmatprep.subr.mxu0 0.0
    %296 = vmatpush1.msra.mxu0 %v77
    %297 = vmatprep.subr.mxu0 0.0
    %298 = vmatpush1.msra.mxu0 %v76
    %299 = vmatprep.subr.mxu0 0.0
    %300 = vmatpush1.msra.mxu0 %v75
    %301 = vmatprep.subr.mxu0 0.0
    %302 = vmatpush2.msra.mxu0 0.0
    %303 = vmatprep.subr.mxu0 0.0
    %304 = vmatpush2.msra.mxu0 0.0
    %305 = vmatprep.subr.mxu0 0.0
    %306 = vmatpush2.msra.mxu0 0.0
    %307 = vmatprep.subr.mxu0 0.0
    %308 = vmatpush2.msra.mxu0 0.0
    %309 = vmatprep.subr.mxu0 0.0
    %310 = vmatpush2.msra.mxu0 0.0
    %311 = vmatprep.subr.mxu0 0.0
    %312 = vmatpush2.msra.mxu0 0.0
    %313 = vmatprep.subr.mxu0 0.0
    %314 = vmatpush2.msra.mxu0 0.0
    %315 = vmatprep.subr.mxu0 0.0
    %316 = vmatpush2.msra.mxu0 0.0
    %317 = vmatprep.subr.mxu0 0.0
    %318 = vmatpush2.msra.mxu0 0.0
    %319 = vmatprep.subr.mxu0 0.0
    %320 = vmatpush2.msra.mxu0 0.0
    %321 = vmatprep.subr.mxu0 0.0
    %322 = vmatpush2.msra.mxu0 0.0
    %323 = vmatprep.subr.mxu0 0.0
    %324 = vmatpush2.msra.mxu0 0.0
    %325 = vmatprep.subr.mxu0 0.0
    %326 = vmatpush2.msra.mxu0 0.0
    %327 = vmatprep.subr.mxu0 0.0
    %328 = vmatpush2.msra.mxu0 0.0
    %329 = vmatprep.subr.mxu0 0.0
    %330 = vmatpush2.msra.mxu0 0.0
    %331 = vmatprep.subr.mxu0 0.0
    %332 = vmatpush2.msra.mxu0 0.0
    %333 = vmatprep.mubr.f32.mxu0 0.0
    %334 = vmatmul.mubr.f32.gmra.mxu0 %v267
    %v335 = vpop.f32.mrf.mxu0
    %v336 = vadd.f32 %v265, %v335
    %v337 = vpop.f32.mrf.mxu0
    %338 = vdwg.mxu0
    %v339 = vmax.f32 %v336, 0.0
    %v340 = vlaneseq
    %v341 = vshrl.u32 %v340, 7
    %v342 = vsub.s32 0, %v341
    %v343 = vrot.slane %v88, %v342
    %vm344 = vcmask 523264
    %v346 = vsel %vm344, %v339, 0
    %348 = vmatprep.subr.mxu0 0.0
    %349 = vmatpush1.msra.mxu0 0.0
    %350 = vmatprep.subr.mxu0 0.0
    %351 = vmatpush1.msra.mxu0 0.0
    %352 = vmatprep.subr.mxu0 0.0
    %353 = vmatpush1.msra.mxu0 0.0
    %354 = vmatprep.subr.mxu0 0.0
    %355 = vmatpush1.msra.mxu0 0.0
    %356 = vmatprep.subr.mxu0 0.0
    %357 = vmatpush1.msra.mxu0 0.0
    %358 = vmatprep.subr.mxu0 0.0
    %359 = vmatpush1.msra.mxu0 0.0
    %360 = vmatprep.subr.mxu0 0.0
    %361 = vmatpush1.msra.mxu0 0.0
    %362 = vmatprep.subr.mxu0 0.0
    %363 = vmatpush1.msra.mxu0 0.0
    %364 = vmatprep.subr.mxu0 0.0
    %365 = vmatpush1.msra.mxu0 %v86
    %366 = vmatprep.subr.mxu0 0.0
    %367 = vmatpush1.msra.mxu0 %v85
    %368 = vmatprep.subr.mxu0 0.0
    %369 = vmatpush1.msra.mxu0 %v84
    %370 = vmatprep.subr.mxu0 0.0
    %371 = vmatpush1.msra.mxu0 %v83
    %372 = vmatprep.subr.mxu0 0.0
    %373 = vmatpush1.msra.mxu0 %v82
    %374 = vmatprep.subr.mxu0 0.0
    %375 = vmatpush1.msra.mxu0 %v81
    %376 = vmatprep.subr.mxu0 0.0
    %377 = vmatpush1.msra.mxu0 %v80
    %378 = vmatprep.subr.mxu0 0.0
    %379 = vmatpush1.msra.mxu0 %v79
    %380 = vmatprep.subr.mxu0 0.0
    %381 = vmatpush2.msra.mxu0 0.0
    %382 = vmatprep.subr.mxu0 0.0
    %383 = vmatpush2.msra.mxu0 0.0
    %384 = vmatprep.subr.mxu0 0.0
    %385 = vmatpush2.msra.mxu0 0.0
    %386 = vmatprep.subr.mxu0 0.0
    %387 = vmatpush2.msra.mxu0 0.0
    %388 = vmatprep.subr.mxu0 0.0
    %389 = vmatpush2.msra.mxu0 0.0
    %390 = vmatprep.subr.mxu0 0.0
    %391 = vmatpush2.msra.mxu0 0.0
    %392 = vmatprep.subr.mxu0 0.0
    %393 = vmatpush2.msra.mxu0 0.0
    %394 = vmatprep.subr.mxu0 0.0
    %395 = vmatpush2.msra.mxu0 0.0
    %396 = vmatprep.subr.mxu0 0.0
    %397 = vmatpush2.msra.mxu0 0.0
    %398 = vmatprep.subr.mxu0 0.0
    %399 = vmatpush2.msra.mxu0 0.0
    %400 = vmatprep.subr.mxu0 0.0
    %401 = vmatpush2.msra.mxu0 0.0
    %402 = vmatprep.subr.mxu0 0.0
    %403 = vmatpush2.msra.mxu0 0.0
    %404 = vmatprep.subr.mxu0 0.0
    %405 = vmatpush2.msra.mxu0 0.0
    %406 = vmatprep.subr.mxu0 0.0
    %407 = vmatpush2.msra.mxu0 0.0
    %408 = vmatprep.subr.mxu0 0.0
    %409 = vmatpush2.msra.mxu0 0.0
    %410 = vmatprep.subr.mxu0 0.0
    %411 = vmatpush2.msra.mxu0 0.0
    %412 = vmatprep.mubr.f32.mxu0 0.0
    %413 = vmatmul.mubr.f32.gmra.mxu0 %v346
    %v414 = vpop.f32.mrf.mxu0
    %v415 = vadd.f32 %v343, %v414
    %v416 = vpop.f32.mrf.mxu0
    %417 = vdwg.mxu0
    %vm418 = vcmask 254976
    %v419 = vsel %vm418, %v415, 0.0
    %420 = vadd.xlane.f32.xlu0 %v419
    %v421 = vpop.xlane.xlu0 %420
    %v422 = vrcp.pop 32.0
    %v423 = vmul.f32 %v421, %v422
    %v424 = vsub.f32 %v415, %v423
    %v425 = vmul.f32 %v424, %v424
    %v426 = vsel %vm418, %v425, 0.0
    %427 = vadd.xlane.f32.xlu0 %v426
    %v428 = vpop.xlane.xlu0 %427
    %v429 = vmul.f32 %v428, %v422
    %v430 = vadd.f32 %v429, 1e-06
    %v431 = vrsqrt.pop %v430
    %v432 = vmul.f32 %v424, %v431
    %v433 = vlaneseq
    %v434 = vshrl.u32 %v433, 7
    %v435 = vsub.s32 0, %v434
    %v436 = vrot.slane %v89, %v435
    %v437 = vmul.f32 %v432, %v436
    %v438 = vlaneseq
    %v439 = vshrl.u32 %v438, 7
    %v440 = vsub.s32 0, %v439
    %v441 = vrot.slane %v90, %v440
    %v442 = vadd.f32 %v437, %v441
    %v444 = vlaneseq
    %v445 = vshrl.u32 %v444, 7
    %v446 = vsub.s32 0, %v445
    %v447 = vrot.slane %v114, %v446
    %v448 = vlaneseq
    %v449 = vshrl.u32 %v448, 7
    %v450 = vsub.s32 1, %v449
    %v451 = vrot.slane %v114, %v450
    %v452 = vlaneseq
    %v453 = vshrl.u32 %v452, 7
    %v454 = vsub.s32 2, %v453
    %v455 = vrot.slane %v114, %v454
    %v456 = vlaneseq
    %v457 = vshrl.u32 %v456, 7
    %v458 = vsub.s32 3, %v457
    %v459 = vrot.slane %v114, %v458
    %v460 = vlaneseq
    %v461 = vshrl.u32 %v460, 7
    %v462 = vsub.s32 4, %v461
    %v463 = vrot.slane %v114, %v462
    %v470 = vsel %vm57, %v442, 0
    %472 = vmatprep.subr.mxu0 0.0
    %473 = vmatpush1.msra.mxu0 0.0
    %474 = vmatprep.subr.mxu0 0.0
    %475 = vmatpush1.msra.mxu0 0.0
    %476 = vmatprep.subr.mxu0 0.0
    %477 = vmatpush1.msra.mxu0 0.0
    %478 = vmatprep.subr.mxu0 0.0
    %479 = vmatpush1.msra.mxu0 0.0
    %480 = vmatprep.subr.mxu0 0.0
    %481 = vmatpush1.msra.mxu0 0.0
    %482 = vmatprep.subr.mxu0 0.0
    %483 = vmatpush1.msra.mxu0 0.0
    %484 = vmatprep.subr.mxu0 0.0
    %485 = vmatpush1.msra.mxu0 0.0
    %486 = vmatprep.subr.mxu0 0.0
    %487 = vmatpush1.msra.mxu0 0.0
    %488 = vmatprep.subr.mxu0 0.0
    %489 = vmatpush1.msra.mxu0 0.0
    %490 = vmatprep.subr.mxu0 0.0
    %491 = vmatpush1.msra.mxu0 0.0
    %492 = vmatprep.subr.mxu0 0.0
    %493 = vmatpush1.msra.mxu0 0.0
    %494 = vmatprep.subr.mxu0 0.0
    %495 = vmatpush1.msra.mxu0 0.0
    %496 = vmatprep.subr.mxu0 %v107
    %497 = vmatpush1.msra.mxu0 %v106
    %498 = vmatprep.subr.mxu0 %v102
    %499 = vmatpush1.msra.mxu0 %v101
    %500 = vmatprep.subr.mxu0 %v97
    %501 = vmatpush1.msra.mxu0 %v96
    %502 = vmatprep.subr.mxu0 %v92
    %503 = vmatpush1.msra.mxu0 %v91
    %504 = vmatprep.subr.mxu0 0.0
    %505 = vmatpush2.msra.mxu0 0.0
    %506 = vmatprep.subr.mxu0 0.0
    %507 = vmatpush2.msra.mxu0 0.0
    %508 = vmatprep.subr.mxu0 0.0
    %509 = vmatpush2.msra.mxu0 0.0
    %510 = vmatprep.subr.mxu0 0.0
    %511 = vmatpush2.msra.mxu0 0.0
    %512 = vmatprep.subr.mxu0 0.0
    %513 = vmatpush2.msra.mxu0 0.0
    %514 = vmatprep.subr.mxu0 0.0
    %515 = vmatpush2.msra.mxu0 0.0
    %516 = vmatprep.subr.mxu0 0.0
    %517 = vmatpush2.msra.mxu0 0.0
    %518 = vmatprep.subr.mxu0 0.0
    %519 = vmatpush2.msra.mxu0 0.0
    %520 = vmatprep.subr.mxu0 0.0
    %521 = vmatpush2.msra.mxu0 0.0
    %522 = vmatprep.subr.mxu0 0.0
    %523 = vmatpush2.msra.mxu0 0.0
    %524 = vmatprep.subr.mxu0 0.0
    %525 = vmatpush2.msra.mxu0 0.0
    %526 = vmatprep.subr.mxu0 0.0
    %527 = vmatpush2.msra.mxu0 0.0
    %528 = vmatprep.subr.mxu0 0.0
    %529 = vmatpush2.msra.mxu0 0.0
    %530 = vmatprep.subr.mxu0 0.0
    %531 = vmatpush2.msra.mxu0 0.0
    %532 = vmatprep.subr.mxu0 0.0
    %533 = vmatpush2.msra.mxu0 0.0
    %534 = vmatprep.subr.mxu0 0.0
    %535 = vmatpush2.msra.mxu0 0.0
    %536 = vmatprep.mubr.f32.mxu0 0.0
    %537 = vmatmul.mubr.f32.gmra.mxu0 %v470
    %v538 = vpop.f32.mrf.mxu0
    %v539 = vadd.f32 %v447, %v538
    %v540 = vpop.f32.mrf.mxu0
    %v541 = vadd.f32 %v451, %v540
    %542 = vdwg.mxu0
    %543 = vmatprep.subr.mxu0 0.0
    %544 = vmatpush1.msra.mxu0 0.0
    %545 = vmatprep.subr.mxu0 0.0
    %546 = vmatpush1.msra.mxu0 0.0
    %547 = vmatprep.subr.mxu0 0.0
    %548 = vmatpush1.msra.mxu0 0.0
    %549 = vmatprep.subr.mxu0 0.0
    %550 = vmatpush1.msra.mxu0 0.0
    %551 = vmatprep.subr.mxu0 0.0
    %552 = vmatpush1.msra.mxu0 0.0
    %553 = vmatprep.subr.mxu0 0.0
    %554 = vmatpush1.msra.mxu0 0.0
    %555 = vmatprep.subr.mxu0 0.0
    %556 = vmatpush1.msra.mxu0 0.0
    %557 = vmatprep.subr.mxu0 0.0
    %558 = vmatpush1.msra.mxu0 0.0
    %559 = vmatprep.subr.mxu0 0.0
    %560 = vmatpush1.msra.mxu0 0.0
    %561 = vmatprep.subr.mxu0 0.0
    %562 = vmatpush1.msra.mxu0 0.0
    %563 = vmatprep.subr.mxu0 0.0
    %564 = vmatpush1.msra.mxu0 0.0
    %565 = vmatprep.subr.mxu0 0.0
    %566 = vmatpush1.msra.mxu0 0.0
    %567 = vmatprep.subr.mxu0 %v109
    %568 = vmatpush1.msra.mxu0 %v108
    %569 = vmatprep.subr.mxu0 %v104
    %570 = vmatpush1.msra.mxu0 %v103
    %571 = vmatprep.subr.mxu0 %v99
    %572 = vmatpush1.msra.mxu0 %v98
    %573 = vmatprep.subr.mxu0 %v94
    %574 = vmatpush1.msra.mxu0 %v93
    %575 = vmatprep.subr.mxu0 0.0
    %576 = vmatpush2.msra.mxu0 0.0
    %577 = vmatprep.subr.mxu0 0.0
    %578 = vmatpush2.msra.mxu0 0.0
    %579 = vmatprep.subr.mxu0 0.0
    %580 = vmatpush2.msra.mxu0 0.0
    %581 = vmatprep.subr.mxu0 0.0
    %582 = vmatpush2.msra.mxu0 0.0
    %583 = vmatprep.subr.mxu0 0.0
    %584 = vmatpush2.msra.mxu0 0.0
    %585 = vmatprep.subr.mxu0 0.0
    %586 = vmatpush2.msra.mxu0 0.0
    %587 = vmatprep.subr.mxu0 0.0
    %588 = vmatpush2.msra.mxu0 0.0
    %589 = vmatprep.subr.mxu0 0.0
    %590 = vmatpush2.msra.mxu0 0.0
    %591 = vmatprep.subr.mxu0 0.0
    %592 = vmatpush2.msra.mxu0 0.0
    %593 = vmatprep.subr.mxu0 0.0
    %594 = vmatpush2.msra.mxu0 0.0
    %595 = vmatprep.subr.mxu0 0.0
    %596 = vmatpush2.msra.mxu0 0.0
    %597 = vmatprep.subr.mxu0 0.0
    %598 = vmatpush2.msra.mxu0 0.0
    %599 = vmatprep.subr.mxu0 0.0
    %600 = vmatpush2.msra.mxu0 0.0
    %601 = vmatprep.subr.mxu0 0.0
    %602 = vmatpush2.msra.mxu0 0.0
    %603 = vmatprep.subr.mxu0 0.0
    %604 = vmatpush2.msra.mxu0 0.0
    %605 = vmatprep.subr.mxu0 0.0
    %606 = vmatpush2.msra.mxu0 0.0
    %607 = vmatprep.mubr.f32.mxu0 0.0
    %608 = vmatmul.mubr.f32.gmra.mxu0 %v470
    %v609 = vpop.f32.mrf.mxu0
    %v610 = vadd.f32 %v455, %v609
    %v611 = vpop.f32.mrf.mxu0
    %v612 = vadd.f32 %v459, %v611
    %613 = vdwg.mxu0
    %614 = vmatprep.subr.mxu0 0.0
    %615 = vmatpush1.msra.mxu0 0.0
    %616 = vmatprep.subr.mxu0 0.0
    %617 = vmatpush1.msra.mxu0 0.0
    %618 = vmatprep.subr.mxu0 0.0
    %619 = vmatpush1.msra.mxu0 0.0
    %620 = vmatprep.subr.mxu0 0.0
    %621 = vmatpush1.msra.mxu0 0.0
    %622 = vmatprep.subr.mxu0 0.0
    %623 = vmatpush1.msra.mxu0 0.0
    %624 = vmatprep.subr.mxu0 0.0
    %625 = vmatpush1.msra.mxu0 0.0
    %626 = vmatprep.subr.mxu0 0.0
    %627 = vmatpush1.msra.mxu0 0.0
    %628 = vmatprep.subr.mxu0 0.0
    %629 = vmatpush1.msra.mxu0 0.0
    %630 = vmatprep.subr.mxu0 0.0
    %631 = vmatpush1.msra.mxu0 0.0
    %632 = vmatprep.subr.mxu0 0.0
    %633 = vmatpush1.msra.mxu0 0.0
    %634 = vmatprep.subr.mxu0 0.0
    %635 = vmatpush1.msra.mxu0 0.0
    %636 = vmatprep.subr.mxu0 0.0
    %637 = vmatpush1.msra.mxu0 0.0
    %638 = vmatprep.subr.mxu0 0.0
    %639 = vmatpush1.msra.mxu0 %v110
    %640 = vmatprep.subr.mxu0 0.0
    %641 = vmatpush1.msra.mxu0 %v105
    %642 = vmatprep.subr.mxu0 0.0
    %643 = vmatpush1.msra.mxu0 %v100
    %644 = vmatprep.subr.mxu0 0.0
    %645 = vmatpush1.msra.mxu0 %v95
    %646 = vmatprep.subr.mxu0 0.0
    %647 = vmatpush2.msra.mxu0 0.0
    %648 = vmatprep.subr.mxu0 0.0
    %649 = vmatpush2.msra.mxu0 0.0
    %650 = vmatprep.subr.mxu0 0.0
    %651 = vmatpush2.msra.mxu0 0.0
    %652 = vmatprep.subr.mxu0 0.0
    %653 = vmatpush2.msra.mxu0 0.0
    %654 = vmatprep.subr.mxu0 0.0
    %655 = vmatpush2.msra.mxu0 0.0
    %656 = vmatprep.subr.mxu0 0.0
    %657 = vmatpush2.msra.mxu0 0.0
    %658 = vmatprep.subr.mxu0 0.0
    %659 = vmatpush2.msra.mxu0 0.0
    %660 = vmatprep.subr.mxu0 0.0
    %661 = vmatpush2.msra.mxu0 0.0
    %662 = vmatprep.subr.mxu0 0.0
    %663 = vmatpush2.msra.mxu0 0.0
    %664 = vmatprep.subr.mxu0 0.0
    %665 = vmatpush2.msra.mxu0 0.0
    %666 = vmatprep.subr.mxu0 0.0
    %667 = vmatpush2.msra.mxu0 0.0
    %668 = vmatprep.subr.mxu0 0.0
    %669 = vmatpush2.msra.mxu0 0.0
    %670 = vmatprep.subr.mxu0 0.0
    %671 = vmatpush2.msra.mxu0 0.0
    %672 = vmatprep.subr.mxu0 0.0
    %673 = vmatpush2.msra.mxu0 0.0
    %674 = vmatprep.subr.mxu0 0.0
    %675 = vmatpush2.msra.mxu0 0.0
    %676 = vmatprep.subr.mxu0 0.0
    %677 = vmatpush2.msra.mxu0 0.0
    %678 = vmatprep.mubr.f32.mxu0 0.0
    %679 = vmatmul.mubr.f32.gmra.mxu0 %v470
    %v680 = vpop.f32.mrf.mxu0
    %v681 = vadd.f32 %v463, %v680
    %v682 = vpop.f32.mrf.mxu0
    %683 = vdwg.mxu0
    %v689 = vcombine.low %v539, %v541
    %v690 = vcombine.low %v610, %v612
    %v692 = vunpack.c.l.s4 1983009808
    %v693 = vunpack.c.0.s8 %v692
    %v694 = vlaneseq
    %v695 = vshrl.u32 %v694, 7
    %v696 = vsub.s32 %v693, %v695
    %v697 = vrot.slane %v689, %v696
    %v699 = vunpack.c.l.s4 1983009808
    %v700 = vunpack.c.0.s8 %v699
    %v701 = vlaneseq
    %v702 = vshrl.u32 %v701, 7
    %v703 = vsub.s32 %v700, %v702
    %v704 = vrot.slane %v690, %v703
    %v705 = vcombine.low %v697, %v704
    %v707 = vunpack.c.l.s4 1983009808
    %v708 = vunpack.c.0.s8 %v707
    %v709 = vlaneseq
    %v710 = vshrl.u32 %v709, 7
    %v711 = vsub.s32 %v708, %v710
    %v712 = vrot.slane %v681, %v711
    %715 = vst [vmem:[#allocation8] sm:$0xff] %v705
    %716 = vst [vmem:[#allocation8 + $0x8] sm:$0x3] %v712
    // Predicated region
    $region26: #{tpu_custom_call.1} parent=1 // pred_check
      _
    $region27: #{tpu_custom_call.1} parent=1 // pred_check_branch
      %718 = sbr.rel (0) target = $region29
    $region28: #{tpu_custom_call.1} parent=1 // pred_region
      %s720 = ssub.s32 160, 160
      %721 = vsyncadd [#allocation5], %s720
      %s723 = sshll.u32 [#allocation8], 4
      %s724 = int_to_ptr.vmem [resolvable:$true] %s723
      %726 = dma.vmem_to_hbm [thread:$0]  %s724, 160, %s4, [#allocation5]
    $region29: #{tpu_custom_call.1} parent=1 // pred_fallthru
      _
    // Predicated region
    $region30: #{tpu_custom_call.1} parent=1 // pred_check
      _
    $region31: #{tpu_custom_call.1} parent=1 // pred_check_branch
      %728 = sbr.rel (0) target = $region33
    $region32: #{tpu_custom_call.1} parent=1 // pred_region
      %729 = dma.done [#allocation5], 160
    $region33: #{tpu_custom_call.1} parent=1 // pred_fallthru
      _
    %730 = vsyncpa [#allocation4], 1
    %731 = vsyncpa [#allocation7], 1
    %732 = vsyncpa [#allocation5], 1

</llo_original>
